<compile_context>
chip_gen: v7x
topology: tpu7x:2x2x1
jax: 0.10.0
libtpu: 0.0.40
codegen_flags: <defaults>
</compile_context>

<pallas_src>
import math
import functools

import numpy as np
import jax
import jax.numpy as jnp
from jax import lax
from jax.experimental import pallas as pl
from jax.experimental.pallas import tpu as pltpu


# --------------------------------------------------------------------------
# Small static helpers (trace-time only).
# --------------------------------------------------------------------------
def _vmem_limit_bytes():
    # Generation-aware scoped-VMEM limit: ~5/8 of physical, capped at 80 MiB.
    # (v5e/v6e: 128 MiB -> 80 MiB; v7x: 64 MiB -> 40 MiB.)
    try:
        phys = int(pltpu.get_tpu_info().vmem_capacity_bytes)
    except Exception:
        phys = 64 << 20          # conservative default (v7x-sized)
    return int(min(phys * 5 // 8, 80 << 20))


def _pick_cumsum_chunk(s):
    # Largest divisor of s that is <= 256: bounded [ch, ch] triangular RHS
    # (cheap MXU weight pushes on v5e, <=256 KiB VMEM), never [s, s] for
    # nicely divisible s.
    best = 1
    for d in range(1, min(s, 256) + 1):
        if s % d == 0:
            best = d
    if best < 8 and s <= 2048:
        # TODO(synk): pad s for awkward token counts instead of this fallback.
        best = s
    return best


def _pick_tok_tile(s, width, vmem_limit):
    # Keep double-buffered (cw f32 + mask i8) output blocks within ~1/3 of
    # the VMEM budget; prefer large (up to 1024-row) multiples-of-8 tiles.
    budget = vmem_limit // 3
    max_rows = max(8, budget // (2 * width * 5))
    cap = min(s, max_rows, 1024)
    best = None
    for t in range(8, cap + 1, 8):
        if s % t == 0:
            best = t
    if best is None:
        # TODO(synk): pad s (masked tail) when s has no multiple-of-8 divisor.
        best = s
    return best


# --------------------------------------------------------------------------
# Phase 1: routing.  All working arrays are [e, s] (experts x tokens).
# --------------------------------------------------------------------------
def _route_kernel(xT_ref, uT_ref, gate_ref, idx_ref, cnt_ref, laux_ref, *,
                  capacity, cumsum_chunk, pick_unroll):
    x = xT_ref[...].astype(jnp.float32)          # [e, s] router logits
    u = uT_ref[...].astype(jnp.float32)          # [e, s] uniform(0,1) priority
    e, s = x.shape

    # ---- softmax over experts (sublane axis) ----
    xmax = jnp.max(x, axis=0, keepdims=True)                        # [1, s]
    ex = jnp.exp(x - xmax)
    logits = ex * (1.0 / jnp.sum(ex, axis=0, keepdims=True))        # [e, s]

    # ---- argmax over experts -> one-hot mask (first max on ties) ----
    eid = lax.broadcasted_iota(jnp.int32, (e, s), 0)
    expert_idx = jnp.min(jnp.where(x == xmax, eid, e), axis=0, keepdims=True)
    mask = (eid == expert_idx).astype(jnp.float32)                  # [e, s]

    # ---- per-expert token counts (pre-capacity, as the torch module) ----
    cnt_ref[...] = jnp.sum(mask, axis=1, keepdims=True).astype(jnp.int32)

    # ---- auxiliary load-balancing loss ----
    inv_s = 1.0 / float(s)
    me = jnp.sum(logits, axis=1, keepdims=True) * inv_s             # [e, 1]
    ce = jnp.sum(mask, axis=1, keepdims=True) * inv_s               # [e, 1]
    laux_ref[...] = jnp.sum(me * ce, axis=0, keepdims=True) * float(e)

    # ---- random-priority top-`capacity` selection per expert row ----
    tid = lax.broadcasted_iota(jnp.int32, (e, s), 1)
    work0 = jnp.where(mask > 0.0, u, -1.0)       # exclude unassigned tokens
    sel0 = jnp.zeros((e, s), jnp.float32)

    def pick_one(_, carry):
        work, sel = carry
        cur_max = jnp.max(work, axis=1, keepdims=True)              # [e, 1]
        cand = jnp.where(work == cur_max, tid, s)                   # plain min tie-break
        pick = jnp.min(cand, axis=1, keepdims=True)                 # [e, 1]
        picked = (tid == pick) & (cur_max > -0.5)                   # [e, s]
        sel = sel + picked.astype(jnp.float32)
        work = jnp.where(picked, -1.0, work)
        return work, sel

    if capacity <= 8:                 # small: full unroll for LLO scheduling
        work, sel = work0, sel0
        for _ in range(capacity):
            work, sel = pick_one(0, (work, sel))
    else:                             # large: bounded live ranges, partial unroll
        work, sel = lax.fori_loop(0, capacity, pick_one, (work0, sel0),
                                  unroll=pick_unroll)

    dispatch = mask * sel                                           # [e, s]

    # ---- blocked running cumsum over tokens -> capacity slot per token ----
    # bf16 operands are exact here (0/1 values), accumulation is f32.
    ch = cumsum_chunk
    n_ch = s // ch
    r2 = lax.broadcasted_iota(jnp.int32, (ch, ch), 0)
    c2 = lax.broadcasted_iota(jnp.int32, (ch, ch), 1)
    tri = (r2 <= c2).astype(jnp.float32).astype(jnp.bfloat16)       # [ch, ch]
    carry = jnp.zeros((e, 1), jnp.float32)
    loc_parts = []
    for j in range(n_ch):                                           # static, small
        blk = dispatch[:, j * ch:(j + 1) * ch]                      # [e, ch]
        csum = jnp.dot(blk.astype(jnp.bfloat16), tri,
                       preferred_element_type=jnp.float32) + carry
        loc_parts.append(jnp.sum(blk * (csum - 1.0), axis=0, keepdims=True))
        carry = csum[:, ch - 1:ch]
    loc = loc_parts[0] if n_ch == 1 else jnp.concatenate(loc_parts, axis=1)

    # ---- per-token routing summary consumed by phase 2 ----
    gate_ref[...] = jnp.sum(logits * dispatch, axis=0, keepdims=True)   # [1, s]
    dispatched = jnp.sum(dispatch, axis=0, keepdims=True)               # [1, s]
    flat_idx = expert_idx * capacity + loc.astype(jnp.int32)            # [1, s]
    idx_ref[...] = jnp.where(dispatched > 0.5, flat_idx, -1)


# --------------------------------------------------------------------------
# Phase 2: combine-weight construction, token-tiled, lane-packed output.
# cw[t, k*c + j] = gate[t] * (k*c + j == idx[t])  -- one compare + select per
# output element; the tile writes are the dominant (HBM-roofline) cost.
# --------------------------------------------------------------------------
def _combine_kernel(gate_ref, idx_ref, cw_ref, sm_ref):
    gate = gate_ref[...]                                    # [T, 1] f32
    idx = idx_ref[...]                                      # [T, 1] i32 (-1 = dropped)
    col = lax.broadcasted_iota(jnp.int32, cw_ref.shape, 1)  # [T, e*c]
    hit = col == idx                                        # <=1 lane per token
    cw_ref[...] = jnp.where(hit, gate, 0.0).astype(cw_ref.dtype)
    # gate > 0 whenever a token is dispatched, so `hit` == (cw != 0).
    sm_ref[...] = hit.astype(sm_ref.dtype)


def top1_router(inputs, unif, capacity_factor=1.0, min_capacity=4,
                weight_dtype=jnp.float32, pick_unroll=4):
    """Returns (combine_weights [s,e,c], sec_mask [s,e,c] int8 0/1,
    exp_counts [e] i32, l_aux scalar f32)."""
    s, e = inputs.shape
    capacity = math.ceil(capacity_factor * s / e)
    if capacity < min_capacity:
        capacity = min_capacity
    width = e * capacity

    vmem_limit = _vmem_limit_bytes()
    cumsum_chunk = _pick_cumsum_chunk(s)

    vmem = pl.BlockSpec(memory_space=pltpu.MemorySpace.VMEM)
    # TODO(synk): for s >~ 100K tokens the ~8 live [e, s] f32 arrays exceed the
    # VMEM limit; phase 1 would then need token tiling with a pick-loop carry.
    gate_row, idx_row, cnt, laux = pl.pallas_call(
        functools.partial(_route_kernel, capacity=capacity,
                          cumsum_chunk=cumsum_chunk, pick_unroll=pick_unroll),
        out_shape=(
            jax.ShapeDtypeStruct((1, s), jnp.float32),   # selected gate per token
            jax.ShapeDtypeStruct((1, s), jnp.int32),     # expert*capacity + slot (-1 dropped)
            jax.ShapeDtypeStruct((e, 1), jnp.int32),     # expert counts
            jax.ShapeDtypeStruct((1, 1), jnp.float32),   # l_aux
        ),
        in_specs=[vmem, vmem],
        out_specs=(vmem, vmem, vmem, vmem),
        compiler_params=pltpu.CompilerParams(vmem_limit_bytes=vmem_limit),
    )(inputs.T, unif.T)
    # NOTE: the two [s,e]->[e,s] input transposes are tiny (s*e*4 B each); fold
    # them into the upstream router projection's output layout when possible.

    # Tiny (1, s) -> (s, 1) relayouts of the per-token rows (2*s*4 bytes).
    gate_col = gate_row.reshape(s, 1)
    idx_col = idx_row.reshape(s, 1)

    tok_tile = _pick_tok_tile(s, width, vmem_limit)
    cw_flat, sm_flat = pl.pallas_call(
        _combine_kernel,
        grid=(s // tok_tile,),
        in_specs=[
            pl.BlockSpec((tok_tile, 1), lambda i: (i, 0)),
            pl.BlockSpec((tok_tile, 1), lambda i: (i, 0)),
        ],
        out_specs=(
            pl.BlockSpec((tok_tile, width), lambda i: (i, 0)),
            pl.BlockSpec((tok_tile, width), lambda i: (i, 0)),
        ),
        out_shape=(
            jax.ShapeDtypeStruct((s, width), weight_dtype),
            jax.ShapeDtypeStruct((s, width), jnp.int8),
        ),
        compiler_params=pltpu.CompilerParams(
            dimension_semantics=("parallel",),           # megacore on v7x
            vmem_limit_bytes=vmem_limit,
        ),
    )(gate_col, idx_col)

    combine_weights = cw_flat.reshape(s, e, capacity)    # free row-major reshape
    # sec_mask kept as int8 0/1 straight from the kernel (avoids a full-tensor
    # bool-cast pass); semantically it equals `combine_weights != 0`.
    sec_mask = sm_flat.reshape(s, e, capacity)
    exp_counts = cnt.reshape(e)      # TODO(synk): torch returns int64 on cpu
    l_aux = laux[0, 0]               # torch: moe_env.add_loss(l_aux)
    return combine_weights, sec_mask, exp_counts, l_aux


def _top1_router_ref(inputs, unif, capacity):
    """Pure-JAX reference mirroring the PyTorch code path (topk + scatter)."""
    s, e = inputs.shape
    logits = jax.nn.softmax(inputs, axis=1)
    expert_idx = jnp.argmax(inputs, axis=1)
    expert_mask = jax.nn.one_hot(expert_idx, e, dtype=jnp.float32)
    exp_counts = jnp.sum(expert_mask, axis=0).astype(jnp.int32)
    me = jnp.mean(logits, axis=0)
    ce = jnp.mean(expert_mask, axis=0)
    l_aux = jnp.sum(me * ce) * e
    rand_mask = expert_mask * unif
    _, idx = lax.top_k(rand_mask.T, capacity)             # [e, c]
    cols = jnp.broadcast_to(jnp.arange(e), (capacity, e))
    sel = jnp.zeros((s, e), jnp.float32).at[idx.T, cols].set(1.0)
    dispatch_mask = expert_mask * sel
    csum = jnp.cumsum(dispatch_mask, axis=0) - 1.0
    loc = jnp.sum(dispatch_mask * csum, axis=1).astype(jnp.int32)
    loc_oh = jax.nn.one_hot(loc, capacity, dtype=jnp.float32)
    gated = logits * dispatch_mask
    cw = gated[:, :, None] * loc_oh[:, None, :]
    return cw, cw != 0.0, exp_counts, l_aux


if __name__ == "__main__":
    S, E = 64, 8                       # tokens, experts
    CAPACITY_FACTOR, MIN_CAPACITY = 1.0, 4

    key = jax.random.PRNGKey(0)
    k_in, k_u = jax.random.split(key)
    inputs = jax.random.normal(k_in, (S, E), dtype=jnp.float32)
    # noisy_func is None in this config; `unif` plays the role of
    # Uniform(0,1).rsample used for random dispatch priority.
    # TODO(synk): torch's RNG stream cannot be reproduced; jax.random.uniform is used instead.
    unif = jax.random.uniform(k_u, (S, E), dtype=jnp.float32)

    cw, sec_mask, exp_counts, l_aux = top1_router(inputs, unif, CAPACITY_FACTOR, MIN_CAPACITY)
    jax.block_until_ready(cw)

    capacity = max(math.ceil(CAPACITY_FACTOR * S / E), MIN_CAPACITY)
    cw_r, sm_r, cnt_r, laux_r = _top1_router_ref(inputs, unif, capacity)
    np.testing.assert_allclose(np.asarray(cw), np.asarray(cw_r), rtol=1e-5, atol=1e-6)
    assert bool(jnp.all((sec_mask != 0) == sm_r))
    assert bool(jnp.all(exp_counts == cnt_r))
    np.testing.assert_allclose(float(l_aux), float(laux_r), rtol=1e-5, atol=1e-6)
    print("KERNEL_OK")
</pallas_src>

<mosaic_0001>
module attributes {stable_mosaic.version = 11 : i64} {
  func.func @_route_kernel(%arg0: memref<8x64xf32, #tpu.memory_space<vmem>>, %arg1: memref<8x64xf32, #tpu.memory_space<vmem>>, %arg2: memref<1x64xf32, #tpu.memory_space<vmem>>, %arg3: memref<1x64xi32, #tpu.memory_space<vmem>>, %arg4: memref<8x1xi32, #tpu.memory_space<vmem>>, %arg5: memref<1x1xf32, #tpu.memory_space<vmem>>) attributes {dimension_semantics = [], scalar_prefetch = 0 : i64, scratch_operands = 0 : i64, tpu.core_type = #tpu.core_type<tc>} {
    %c0 = arith.constant 0 : index
    %c0_0 = arith.constant 0 : index
    %0 = vector.load %arg0[%c0, %c0_0] : memref<8x64xf32, #tpu.memory_space<vmem>>, vector<8x64xf32>
    %c0_1 = arith.constant 0 : index
    %c0_2 = arith.constant 0 : index
    %1 = vector.load %arg1[%c0_1, %c0_2] : memref<8x64xf32, #tpu.memory_space<vmem>>, vector<8x64xf32>
    %cst = arith.constant dense<0xFF800000> : vector<64xf32>
    %2 = vector.multi_reduction <maximumf>, %0, %cst [0] : vector<8x64xf32> to vector<64xf32>
    %3 = vector.shape_cast %2 : vector<64xf32> to vector<1x64xf32>
    %4 = vector.broadcast %3 : vector<1x64xf32> to vector<8x64xf32>
    %5 = arith.subf %0, %4 : vector<8x64xf32>
    %6 = math.exp %5 : vector<8x64xf32>
    %cst_3 = arith.constant dense<0.000000e+00> : vector<64xf32>
    %7 = vector.multi_reduction <add>, %6, %cst_3 [0] : vector<8x64xf32> to vector<64xf32>
    %8 = vector.shape_cast %7 : vector<64xf32> to vector<1x64xf32>
    %cst_4 = arith.constant 1.000000e+00 : f32
    %9 = vector.broadcast %cst_4 : f32 to vector<1x64xf32>
    %10 = arith.divf %9, %8 : vector<1x64xf32>
    %11 = vector.broadcast %10 : vector<1x64xf32> to vector<8x64xf32>
    %12 = arith.mulf %6, %11 : vector<8x64xf32>
    %13 = tpu.iota {dimensions = array<i32: 0>} : vector<8x64xi32>
    %14 = vector.broadcast %3 : vector<1x64xf32> to vector<8x64xf32>
    %15 = arith.cmpf oeq, %0, %14 : vector<8x64xf32>
    %c8_i32 = arith.constant 8 : i32
    %16 = vector.broadcast %c8_i32 : i32 to vector<8x64xi32>
    %17 = arith.select %15, %13, %16 : vector<8x64xi1>, vector<8x64xi32>
    %cst_5 = arith.constant dense<2147483647> : vector<64xi32>
    %18 = vector.multi_reduction <minsi>, %17, %cst_5 [0] : vector<8x64xi32> to vector<64xi32>
    %19 = vector.shape_cast %18 : vector<64xi32> to vector<1x64xi32>
    %20 = vector.broadcast %19 : vector<1x64xi32> to vector<8x64xi32>
    %21 = arith.cmpi eq, %13, %20 : vector<8x64xi32>
    %22 = arith.extui %21 : vector<8x64xi1> to vector<8x64xi32>
    %23 = arith.sitofp %22 : vector<8x64xi32> to vector<8x64xf32>
    %cst_6 = arith.constant dense<0.000000e+00> : vector<8xf32>
    %24 = vector.multi_reduction <add>, %23, %cst_6 [1] : vector<8x64xf32> to vector<8xf32>
    %25 = vector.shape_cast %24 : vector<8xf32> to vector<8x1xf32>
    %26 = arith.fptosi %25 : vector<8x1xf32> to vector<8x1xi32>
    %c0_7 = arith.constant 0 : index
    %c0_8 = arith.constant 0 : index
    %27 = vector.load %arg4[%c0_7, %c0_8] : memref<8x1xi32, #tpu.memory_space<vmem>>, vector<8x1xi32>
    tpu.vector_store %arg4[%c0_7, %c0_8], %26 {strides = array<i32>} : memref<8x1xi32, #tpu.memory_space<vmem>>, vector<8x1xi32>,
    %cst_9 = arith.constant dense<0.000000e+00> : vector<8xf32>
    %28 = vector.multi_reduction <add>, %12, %cst_9 [1] : vector<8x64xf32> to vector<8xf32>
    %29 = vector.shape_cast %28 : vector<8xf32> to vector<8x1xf32>
    %cst_10 = arith.constant 1.562500e-02 : f32
    %30 = vector.broadcast %cst_10 : f32 to vector<8x1xf32>
    %31 = arith.mulf %29, %30 : vector<8x1xf32>
    %cst_11 = arith.constant dense<0.000000e+00> : vector<8xf32>
    %32 = vector.multi_reduction <add>, %23, %cst_11 [1] : vector<8x64xf32> to vector<8xf32>
    %33 = vector.shape_cast %32 : vector<8xf32> to vector<8x1xf32>
    %cst_12 = arith.constant 1.562500e-02 : f32
    %34 = vector.broadcast %cst_12 : f32 to vector<8x1xf32>
    %35 = arith.mulf %33, %34 : vector<8x1xf32>
    %36 = arith.mulf %31, %35 : vector<8x1xf32>
    %cst_13 = arith.constant dense<0.000000e+00> : vector<1xf32>
    %37 = vector.multi_reduction <add>, %36, %cst_13 [0] : vector<8x1xf32> to vector<1xf32>
    %38 = vector.shape_cast %37 : vector<1xf32> to vector<1x1xf32>
    %cst_14 = arith.constant 8.000000e+00 : f32
    %39 = vector.broadcast %cst_14 : f32 to vector<1x1xf32>
    %40 = arith.mulf %38, %39 : vector<1x1xf32>
    %c0_15 = arith.constant 0 : index
    %c0_16 = arith.constant 0 : index
    %41 = vector.load %arg5[%c0_15, %c0_16] : memref<1x1xf32, #tpu.memory_space<vmem>>, vector<1x1xf32>
    tpu.vector_store %arg5[%c0_15, %c0_16], %40 {strides = array<i32>} : memref<1x1xf32, #tpu.memory_space<vmem>>, vector<1x1xf32>,
    %42 = tpu.iota {dimensions = array<i32: 1>} : vector<8x64xi32>
    %cst_17 = arith.constant 0.000000e+00 : f32
    %43 = vector.broadcast %cst_17 : f32 to vector<8x64xf32>
    %44 = arith.cmpf ogt, %23, %43 : vector<8x64xf32>
    %cst_18 = arith.constant -1.000000e+00 : f32
    %45 = vector.broadcast %cst_18 : f32 to vector<8x64xf32>
    %46 = arith.select %44, %1, %45 : vector<8x64xi1>, vector<8x64xf32>
    %cst_19 = arith.constant 0.000000e+00 : f32
    %47 = vector.broadcast %cst_19 : f32 to vector<8x64xf32>
    %cst_20 = arith.constant dense<0xFF800000> : vector<8xf32>
    %48 = vector.multi_reduction <maximumf>, %46, %cst_20 [1] : vector<8x64xf32> to vector<8xf32>
    %49 = vector.shape_cast %48 : vector<8xf32> to vector<8x1xf32>
    %50 = vector.broadcast %49 : vector<8x1xf32> to vector<8x64xf32>
    %51 = arith.cmpf oeq, %46, %50 : vector<8x64xf32>
    %c64_i32 = arith.constant 64 : i32
    %52 = vector.broadcast %c64_i32 : i32 to vector<8x64xi32>
    %53 = arith.select %51, %42, %52 : vector<8x64xi1>, vector<8x64xi32>
    %cst_21 = arith.constant dense<2147483647> : vector<8xi32>
    %54 = vector.multi_reduction <minsi>, %53, %cst_21 [1] : vector<8x64xi32> to vector<8xi32>
    %55 = vector.shape_cast %54 : vector<8xi32> to vector<8x1xi32>
    %56 = vector.broadcast %55 : vector<8x1xi32> to vector<8x64xi32>
    %57 = arith.cmpi eq, %42, %56 : vector<8x64xi32>
    %cst_22 = arith.constant -5.000000e-01 : f32
    %58 = vector.broadcast %cst_22 : f32 to vector<8x1xf32>
    %59 = arith.cmpf ogt, %49, %58 : vector<8x1xf32>
    %60 = vector.broadcast %59 : vector<8x1xi1> to vector<8x64xi1>
    %61 = arith.andi %57, %60 : vector<8x64xi1>
    %62 = arith.extui %61 : vector<8x64xi1> to vector<8x64xi32>
    %63 = arith.sitofp %62 : vector<8x64xi32> to vector<8x64xf32>
    %64 = arith.addf %47, %63 : vector<8x64xf32>
    %cst_23 = arith.constant -1.000000e+00 : f32
    %65 = vector.broadcast %cst_23 : f32 to vector<8x64xf32>
    %66 = arith.select %61, %65, %46 : vector<8x64xi1>, vector<8x64xf32>
    %cst_24 = arith.constant dense<0xFF800000> : vector<8xf32>
    %67 = vector.multi_reduction <maximumf>, %66, %cst_24 [1] : vector<8x64xf32> to vector<8xf32>
    %68 = vector.shape_cast %67 : vector<8xf32> to vector<8x1xf32>
    %69 = vector.broadcast %68 : vector<8x1xf32> to vector<8x64xf32>
    %70 = arith.cmpf oeq, %66, %69 : vector<8x64xf32>
    %c64_i32_25 = arith.constant 64 : i32
    %71 = vector.broadcast %c64_i32_25 : i32 to vector<8x64xi32>
    %72 = arith.select %70, %42, %71 : vector<8x64xi1>, vector<8x64xi32>
    %cst_26 = arith.constant dense<2147483647> : vector<8xi32>
    %73 = vector.multi_reduction <minsi>, %72, %cst_26 [1] : vector<8x64xi32> to vector<8xi32>
    %74 = vector.shape_cast %73 : vector<8xi32> to vector<8x1xi32>
    %75 = vector.broadcast %74 : vector<8x1xi32> to vector<8x64xi32>
    %76 = arith.cmpi eq, %42, %75 : vector<8x64xi32>
    %cst_27 = arith.constant -5.000000e-01 : f32
    %77 = vector.broadcast %cst_27 : f32 to vector<8x1xf32>
    %78 = arith.cmpf ogt, %68, %77 : vector<8x1xf32>
    %79 = vector.broadcast %78 : vector<8x1xi1> to vector<8x64xi1>
    %80 = arith.andi %76, %79 : vector<8x64xi1>
    %81 = arith.extui %80 : vector<8x64xi1> to vector<8x64xi32>
    %82 = arith.sitofp %81 : vector<8x64xi32> to vector<8x64xf32>
    %83 = arith.addf %64, %82 : vector<8x64xf32>
    %cst_28 = arith.constant -1.000000e+00 : f32
    %84 = vector.broadcast %cst_28 : f32 to vector<8x64xf32>
    %85 = arith.select %80, %84, %66 : vector<8x64xi1>, vector<8x64xf32>
    %cst_29 = arith.constant dense<0xFF800000> : vector<8xf32>
    %86 = vector.multi_reduction <maximumf>, %85, %cst_29 [1] : vector<8x64xf32> to vector<8xf32>
    %87 = vector.shape_cast %86 : vector<8xf32> to vector<8x1xf32>
    %88 = vector.broadcast %87 : vector<8x1xf32> to vector<8x64xf32>
    %89 = arith.cmpf oeq, %85, %88 : vector<8x64xf32>
    %c64_i32_30 = arith.constant 64 : i32
    %90 = vector.broadcast %c64_i32_30 : i32 to vector<8x64xi32>
    %91 = arith.select %89, %42, %90 : vector<8x64xi1>, vector<8x64xi32>
    %cst_31 = arith.constant dense<2147483647> : vector<8xi32>
    %92 = vector.multi_reduction <minsi>, %91, %cst_31 [1] : vector<8x64xi32> to vector<8xi32>
    %93 = vector.shape_cast %92 : vector<8xi32> to vector<8x1xi32>
    %94 = vector.broadcast %93 : vector<8x1xi32> to vector<8x64xi32>
    %95 = arith.cmpi eq, %42, %94 : vector<8x64xi32>
    %cst_32 = arith.constant -5.000000e-01 : f32
    %96 = vector.broadcast %cst_32 : f32 to vector<8x1xf32>
    %97 = arith.cmpf ogt, %87, %96 : vector<8x1xf32>
    %98 = vector.broadcast %97 : vector<8x1xi1> to vector<8x64xi1>
    %99 = arith.andi %95, %98 : vector<8x64xi1>
    %100 = arith.extui %99 : vector<8x64xi1> to vector<8x64xi32>
    %101 = arith.sitofp %100 : vector<8x64xi32> to vector<8x64xf32>
    %102 = arith.addf %83, %101 : vector<8x64xf32>
    %cst_33 = arith.constant -1.000000e+00 : f32
    %103 = vector.broadcast %cst_33 : f32 to vector<8x64xf32>
    %104 = arith.select %99, %103, %85 : vector<8x64xi1>, vector<8x64xf32>
    %cst_34 = arith.constant dense<0xFF800000> : vector<8xf32>
    %105 = vector.multi_reduction <maximumf>, %104, %cst_34 [1] : vector<8x64xf32> to vector<8xf32>
    %106 = vector.shape_cast %105 : vector<8xf32> to vector<8x1xf32>
    %107 = vector.broadcast %106 : vector<8x1xf32> to vector<8x64xf32>
    %108 = arith.cmpf oeq, %104, %107 : vector<8x64xf32>
    %c64_i32_35 = arith.constant 64 : i32
    %109 = vector.broadcast %c64_i32_35 : i32 to vector<8x64xi32>
    %110 = arith.select %108, %42, %109 : vector<8x64xi1>, vector<8x64xi32>
    %cst_36 = arith.constant dense<2147483647> : vector<8xi32>
    %111 = vector.multi_reduction <minsi>, %110, %cst_36 [1] : vector<8x64xi32> to vector<8xi32>
    %112 = vector.shape_cast %111 : vector<8xi32> to vector<8x1xi32>
    %113 = vector.broadcast %112 : vector<8x1xi32> to vector<8x64xi32>
    %114 = arith.cmpi eq, %42, %113 : vector<8x64xi32>
    %cst_37 = arith.constant -5.000000e-01 : f32
    %115 = vector.broadcast %cst_37 : f32 to vector<8x1xf32>
    %116 = arith.cmpf ogt, %106, %115 : vector<8x1xf32>
    %117 = vector.broadcast %116 : vector<8x1xi1> to vector<8x64xi1>
    %118 = arith.andi %114, %117 : vector<8x64xi1>
    %119 = arith.extui %118 : vector<8x64xi1> to vector<8x64xi32>
    %120 = arith.sitofp %119 : vector<8x64xi32> to vector<8x64xf32>
    %121 = arith.addf %102, %120 : vector<8x64xf32>
    %cst_38 = arith.constant -1.000000e+00 : f32
    %122 = vector.broadcast %cst_38 : f32 to vector<8x64xf32>
    %123 = arith.select %118, %122, %104 : vector<8x64xi1>, vector<8x64xf32>
    %cst_39 = arith.constant dense<0xFF800000> : vector<8xf32>
    %124 = vector.multi_reduction <maximumf>, %123, %cst_39 [1] : vector<8x64xf32> to vector<8xf32>
    %125 = vector.shape_cast %124 : vector<8xf32> to vector<8x1xf32>
    %126 = vector.broadcast %125 : vector<8x1xf32> to vector<8x64xf32>
    %127 = arith.cmpf oeq, %123, %126 : vector<8x64xf32>
    %c64_i32_40 = arith.constant 64 : i32
    %128 = vector.broadcast %c64_i32_40 : i32 to vector<8x64xi32>
    %129 = arith.select %127, %42, %128 : vector<8x64xi1>, vector<8x64xi32>
    %cst_41 = arith.constant dense<2147483647> : vector<8xi32>
    %130 = vector.multi_reduction <minsi>, %129, %cst_41 [1] : vector<8x64xi32> to vector<8xi32>
    %131 = vector.shape_cast %130 : vector<8xi32> to vector<8x1xi32>
    %132 = vector.broadcast %131 : vector<8x1xi32> to vector<8x64xi32>
    %133 = arith.cmpi eq, %42, %132 : vector<8x64xi32>
    %cst_42 = arith.constant -5.000000e-01 : f32
    %134 = vector.broadcast %cst_42 : f32 to vector<8x1xf32>
    %135 = arith.cmpf ogt, %125, %134 : vector<8x1xf32>
    %136 = vector.broadcast %135 : vector<8x1xi1> to vector<8x64xi1>
    %137 = arith.andi %133, %136 : vector<8x64xi1>
    %138 = arith.extui %137 : vector<8x64xi1> to vector<8x64xi32>
    %139 = arith.sitofp %138 : vector<8x64xi32> to vector<8x64xf32>
    %140 = arith.addf %121, %139 : vector<8x64xf32>
    %cst_43 = arith.constant -1.000000e+00 : f32
    %141 = vector.broadcast %cst_43 : f32 to vector<8x64xf32>
    %142 = arith.select %137, %141, %123 : vector<8x64xi1>, vector<8x64xf32>
    %cst_44 = arith.constant dense<0xFF800000> : vector<8xf32>
    %143 = vector.multi_reduction <maximumf>, %142, %cst_44 [1] : vector<8x64xf32> to vector<8xf32>
    %144 = vector.shape_cast %143 : vector<8xf32> to vector<8x1xf32>
    %145 = vector.broadcast %144 : vector<8x1xf32> to vector<8x64xf32>
    %146 = arith.cmpf oeq, %142, %145 : vector<8x64xf32>
    %c64_i32_45 = arith.constant 64 : i32
    %147 = vector.broadcast %c64_i32_45 : i32 to vector<8x64xi32>
    %148 = arith.select %146, %42, %147 : vector<8x64xi1>, vector<8x64xi32>
    %cst_46 = arith.constant dense<2147483647> : vector<8xi32>
    %149 = vector.multi_reduction <minsi>, %148, %cst_46 [1] : vector<8x64xi32> to vector<8xi32>
    %150 = vector.shape_cast %149 : vector<8xi32> to vector<8x1xi32>
    %151 = vector.broadcast %150 : vector<8x1xi32> to vector<8x64xi32>
    %152 = arith.cmpi eq, %42, %151 : vector<8x64xi32>
    %cst_47 = arith.constant -5.000000e-01 : f32
    %153 = vector.broadcast %cst_47 : f32 to vector<8x1xf32>
    %154 = arith.cmpf ogt, %144, %153 : vector<8x1xf32>
    %155 = vector.broadcast %154 : vector<8x1xi1> to vector<8x64xi1>
    %156 = arith.andi %152, %155 : vector<8x64xi1>
    %157 = arith.extui %156 : vector<8x64xi1> to vector<8x64xi32>
    %158 = arith.sitofp %157 : vector<8x64xi32> to vector<8x64xf32>
    %159 = arith.addf %140, %158 : vector<8x64xf32>
    %cst_48 = arith.constant -1.000000e+00 : f32
    %160 = vector.broadcast %cst_48 : f32 to vector<8x64xf32>
    %161 = arith.select %156, %160, %142 : vector<8x64xi1>, vector<8x64xf32>
    %cst_49 = arith.constant dense<0xFF800000> : vector<8xf32>
    %162 = vector.multi_reduction <maximumf>, %161, %cst_49 [1] : vector<8x64xf32> to vector<8xf32>
    %163 = vector.shape_cast %162 : vector<8xf32> to vector<8x1xf32>
    %164 = vector.broadcast %163 : vector<8x1xf32> to vector<8x64xf32>
    %165 = arith.cmpf oeq, %161, %164 : vector<8x64xf32>
    %c64_i32_50 = arith.constant 64 : i32
    %166 = vector.broadcast %c64_i32_50 : i32 to vector<8x64xi32>
    %167 = arith.select %165, %42, %166 : vector<8x64xi1>, vector<8x64xi32>
    %cst_51 = arith.constant dense<2147483647> : vector<8xi32>
    %168 = vector.multi_reduction <minsi>, %167, %cst_51 [1] : vector<8x64xi32> to vector<8xi32>
    %169 = vector.shape_cast %168 : vector<8xi32> to vector<8x1xi32>
    %170 = vector.broadcast %169 : vector<8x1xi32> to vector<8x64xi32>
    %171 = arith.cmpi eq, %42, %170 : vector<8x64xi32>
    %cst_52 = arith.constant -5.000000e-01 : f32
    %172 = vector.broadcast %cst_52 : f32 to vector<8x1xf32>
    %173 = arith.cmpf ogt, %163, %172 : vector<8x1xf32>
    %174 = vector.broadcast %173 : vector<8x1xi1> to vector<8x64xi1>
    %175 = arith.andi %171, %174 : vector<8x64xi1>
    %176 = arith.extui %175 : vector<8x64xi1> to vector<8x64xi32>
    %177 = arith.sitofp %176 : vector<8x64xi32> to vector<8x64xf32>
    %178 = arith.addf %159, %177 : vector<8x64xf32>
    %cst_53 = arith.constant -1.000000e+00 : f32
    %179 = vector.broadcast %cst_53 : f32 to vector<8x64xf32>
    %180 = arith.select %175, %179, %161 : vector<8x64xi1>, vector<8x64xf32>
    %cst_54 = arith.constant dense<0xFF800000> : vector<8xf32>
    %181 = vector.multi_reduction <maximumf>, %180, %cst_54 [1] : vector<8x64xf32> to vector<8xf32>
    %182 = vector.shape_cast %181 : vector<8xf32> to vector<8x1xf32>
    %183 = vector.broadcast %182 : vector<8x1xf32> to vector<8x64xf32>
    %184 = arith.cmpf oeq, %180, %183 : vector<8x64xf32>
    %c64_i32_55 = arith.constant 64 : i32
    %185 = vector.broadcast %c64_i32_55 : i32 to vector<8x64xi32>
    %186 = arith.select %184, %42, %185 : vector<8x64xi1>, vector<8x64xi32>
    %cst_56 = arith.constant dense<2147483647> : vector<8xi32>
    %187 = vector.multi_reduction <minsi>, %186, %cst_56 [1] : vector<8x64xi32> to vector<8xi32>
    %188 = vector.shape_cast %187 : vector<8xi32> to vector<8x1xi32>
    %189 = vector.broadcast %188 : vector<8x1xi32> to vector<8x64xi32>
    %190 = arith.cmpi eq, %42, %189 : vector<8x64xi32>
    %cst_57 = arith.constant -5.000000e-01 : f32
    %191 = vector.broadcast %cst_57 : f32 to vector<8x1xf32>
    %192 = arith.cmpf ogt, %182, %191 : vector<8x1xf32>
    %193 = vector.broadcast %192 : vector<8x1xi1> to vector<8x64xi1>
    %194 = arith.andi %190, %193 : vector<8x64xi1>
    %195 = arith.extui %194 : vector<8x64xi1> to vector<8x64xi32>
    %196 = arith.sitofp %195 : vector<8x64xi32> to vector<8x64xf32>
    %197 = arith.addf %178, %196 : vector<8x64xf32>
    %198 = arith.mulf %23, %197 : vector<8x64xf32>
    %199 = tpu.iota {dimensions = array<i32: 0>} : vector<64x64xi32>
    %200 = tpu.iota {dimensions = array<i32: 1>} : vector<64x64xi32>
    %201 = arith.cmpi sle, %199, %200 : vector<64x64xi32>
    %202 = arith.extui %201 : vector<64x64xi1> to vector<64x64xi32>
    %203 = arith.sitofp %202 : vector<64x64xi32> to vector<64x64xf32>
    %204 = arith.truncf %203 : vector<64x64xf32> to vector<64x64xbf16>
    %cst_58 = arith.constant 0.000000e+00 : f32
    %205 = vector.broadcast %cst_58 : f32 to vector<8x1xf32>
    %206 = arith.truncf %198 : vector<8x64xf32> to vector<8x64xbf16>
    %cst_59 = arith.constant dense<0.000000e+00> : vector<8x64xf32>
    %207 = tpu.matmul %206, %204, %cst_59 {dimension_numbers = #tpu.dot_dimension_numbers<[1], [0], [0], [1], [0, 0, 1, 1], [], []>} : vector<8x64xbf16>, vector<64x64xbf16>, vector<8x64xf32> -> vector<8x64xf32>
    %208 = vector.broadcast %205 : vector<8x1xf32> to vector<8x64xf32>
    %209 = arith.addf %207, %208 : vector<8x64xf32>
    %cst_60 = arith.constant 1.000000e+00 : f32
    %210 = vector.broadcast %cst_60 : f32 to vector<8x64xf32>
    %211 = arith.subf %209, %210 : vector<8x64xf32>
    %212 = arith.mulf %198, %211 : vector<8x64xf32>
    %cst_61 = arith.constant dense<0.000000e+00> : vector<64xf32>
    %213 = vector.multi_reduction <add>, %212, %cst_61 [0] : vector<8x64xf32> to vector<64xf32>
    %214 = vector.shape_cast %213 : vector<64xf32> to vector<1x64xf32>
    %215 = arith.mulf %12, %198 : vector<8x64xf32>
    %cst_62 = arith.constant dense<0.000000e+00> : vector<64xf32>
    %216 = vector.multi_reduction <add>, %215, %cst_62 [0] : vector<8x64xf32> to vector<64xf32>
    %217 = vector.shape_cast %216 : vector<64xf32> to vector<1x64xf32>
    %c0_63 = arith.constant 0 : index
    %c0_64 = arith.constant 0 : index
    %218 = vector.load %arg2[%c0_63, %c0_64] : memref<1x64xf32, #tpu.memory_space<vmem>>, vector<1x64xf32>
    tpu.vector_store %arg2[%c0_63, %c0_64], %217 {strides = array<i32>} : memref<1x64xf32, #tpu.memory_space<vmem>>, vector<1x64xf32>,
    %cst_65 = arith.constant dense<0.000000e+00> : vector<64xf32>
    %219 = vector.multi_reduction <add>, %198, %cst_65 [0] : vector<8x64xf32> to vector<64xf32>
    %220 = vector.shape_cast %219 : vector<64xf32> to vector<1x64xf32>
    %c8_i32_66 = arith.constant 8 : i32
    %221 = vector.broadcast %c8_i32_66 : i32 to vector<1x64xi32>
    %222 = arith.muli %19, %221 : vector<1x64xi32>
    %223 = arith.fptosi %214 : vector<1x64xf32> to vector<1x64xi32>
    %224 = arith.addi %222, %223 : vector<1x64xi32>
    %cst_67 = arith.constant 5.000000e-01 : f32
    %225 = vector.broadcast %cst_67 : f32 to vector<1x64xf32>
    %226 = arith.cmpf ogt, %220, %225 : vector<1x64xf32>
    %c-1_i32 = arith.constant -1 : i32
    %227 = vector.broadcast %c-1_i32 : i32 to vector<1x64xi32>
    %228 = arith.select %226, %224, %227 : vector<1x64xi1>, vector<1x64xi32>
    %c0_68 = arith.constant 0 : index
    %c0_69 = arith.constant 0 : index
    %229 = vector.load %arg3[%c0_68, %c0_69] : memref<1x64xi32, #tpu.memory_space<vmem>>, vector<1x64xi32>
    tpu.vector_store %arg3[%c0_68, %c0_69], %228 {strides = array<i32>} : memref<1x64xi32, #tpu.memory_space<vmem>>, vector<1x64xi32>,
    return
  }
}

</mosaic_0001>

<llo_original>
// kernel: tpu_custom_call.1
$region0: #{tpu_custom_call.1}
  #allocation0 [shape = 'u32[]', space=smem, size = 0x4, offset = 0x4, fixed_abs, tag = 'smem constant byte address 0x4 - core index']
  #allocation1 [shape = 'u32[144,128]{1,0:T(1,128)}', space=vmem, size = 0x12000, scoped, tag = 'internal scratch']
  %s0 = inlined_call_operand.hbm [shape: f32[8,64], index: 0, kind: input, shape index: {}]
  %s1 = inlined_call_operand.hbm [shape: f32[8,64], index: 1, kind: input, shape index: {}]
  %s2 = inlined_call_operand.hbm [shape: f32[1,64], index: 2, kind: output, shape index: {0}]
  %s3 = inlined_call_operand.hbm [shape: s32[1,64], index: 3, kind: output, shape index: {1}]
  %s4 = inlined_call_operand.vmem [shape: s32[8,1], index: 4, kind: output, shape index: {2}]
  %s5 = inlined_call_operand.hbm [shape: f32[1,1], index: 5, kind: output, shape index: {3}]
  %6 = xla_tuple %s2, %s3, %s4, %s5
  %s7 = sld [smem:[#allocation0]]
  $region50: #{tpu_custom_call.1} parent=0
    _
  %s9 = ssub.s32 1, %s7
  %s10 = scalar_select 0, %s9, %s7
  $region1: #{tpu_custom_call.1} parent=0
    #allocation2 [shape = 'u8[4096]{0}', space=vmem, size = 0x1000, scoped, tag = 'input window, operand 0, single buffered']
    #allocation3 [shape = 's32[1]{0}', space=sflag, size = 0x4, scoped, tag = 'scoped memory for tpu_custom_call.1']
    #allocation4 [shape = 's32[1]{0}', space=sflag, size = 0x4, scoped, tag = 'scoped memory for tpu_custom_call.1']
    #allocation5 [shape = 'u8[4096]{0}', space=vmem, size = 0x1000, scoped, tag = 'input window, operand 1, single buffered']
    #allocation6 [shape = 's32[1]{0}', space=sflag, size = 0x4, scoped, tag = 'scoped memory for tpu_custom_call.1']
    #allocation7 [shape = 'u8[512]{0}', space=vmem, size = 0x400, scoped, tag = 'output window, operand 0, single buffered']
    #allocation8 [shape = 'u8[512]{0}', space=vmem, size = 0x400, scoped, tag = 'output window, operand 1, single buffered']
    #allocation9 [shape = 's32[1]{0}', space=sflag, size = 0x4, scoped, tag = 'scoped memory for tpu_custom_call.1']
    #allocation10 [shape = 'u8[512]{0}', space=vmem, size = 0x400, scoped, tag = 'output window, operand 3, single buffered']
    %11 = vsyncpa [#allocation3], 0
    %12 = vsyncpa [#allocation6], 0
    %13 = vsyncpa [#allocation4], 0
    %14 = vsyncpa [#allocation9], 0
    // Predicated region
    $region2: #{tpu_custom_call.1} parent=1 // pred_check
      _
    $region3: #{tpu_custom_call.1} parent=1 // pred_check_branch
      %16 = sbr.rel (0) target = $region5
    $region4: #{tpu_custom_call.1} parent=1 // pred_region
      %s18 = ssub.s32 128, 128
      %19 = vsyncadd [#allocation3], %s18
      %s21 = sshll.u32 [#allocation2], 4
      %s22 = int_to_ptr.vmem [resolvable:$true] %s21
      %24 = dma.hbm_to_vmem [thread:$0]  %s0, 128, %s22, [#allocation3]
    $region5: #{tpu_custom_call.1} parent=1 // pred_fallthru
      _
    // Predicated region
    $region6: #{tpu_custom_call.1} parent=1 // pred_check
      _
    $region7: #{tpu_custom_call.1} parent=1 // pred_check_branch
      %26 = sbr.rel (0) target = $region9
    $region8: #{tpu_custom_call.1} parent=1 // pred_region
      %s28 = ssub.s32 128, 128
      %29 = vsyncadd [#allocation6], %s28
      %s31 = sshll.u32 [#allocation5], 4
      %s32 = int_to_ptr.vmem [resolvable:$true] %s31
      %34 = dma.hbm_to_vmem [thread:$0]  %s1, 128, %s32, [#allocation6]
    $region9: #{tpu_custom_call.1} parent=1 // pred_fallthru
      _
    // Predicated region
    $region10: #{tpu_custom_call.1} parent=1 // pred_check
      _
    $region11: #{tpu_custom_call.1} parent=1 // pred_check_branch
      %36 = sbr.rel (0) target = $region13
    $region12: #{tpu_custom_call.1} parent=1 // pred_region
      %37 = dma.done [#allocation3], 128
    $region13: #{tpu_custom_call.1} parent=1 // pred_fallthru
      _
    // Predicated region
    $region14: #{tpu_custom_call.1} parent=1 // pred_check
      _
    $region15: #{tpu_custom_call.1} parent=1 // pred_check_branch
      %39 = sbr.rel (0) target = $region17
    $region16: #{tpu_custom_call.1} parent=1 // pred_region
      %40 = dma.done [#allocation6], 128
    $region17: #{tpu_custom_call.1} parent=1 // pred_fallthru
      _
    %v42 = vld [vmem:[#allocation2] sm:$0xff]
    %v43 = vld [vmem:[#allocation5] sm:$0xff]
    %vm44 = vcmask 523264
    %v45 = vsel %vm44, %v42, -inf
    %v46 = vrot.slane %v45, 4
    %v47 = vmax.f32 %v45, %v46
    %v48 = vrot.slane %v47, 2
    %v49 = vmax.f32 %v47, %v48
    %v50 = vrot.slane %v49, 1
    %v51 = vmax.f32 %v49, %v50
    %v52 = vsub.f32 %v42, %v51
    %v53 = vmul.f32 %v52, 1.442695
    %v54 = vpow.pop %v53
    %v55 = vsel %vm44, %v54, 0.0
    %v56 = vrot.slane %v55, 4
    %v57 = vadd.f32 %v55, %v56
    %v58 = vrot.slane %v57, 2
    %v59 = vadd.f32 %v57, %v58
    %v60 = vrot.slane %v59, 1
    %v61 = vadd.f32 %v59, %v60
    %v62 = vrcp.pop %v61
    %v63 = vmul.f32 1.0, %v62
    %v64 = vmul.f32 %v54, %v63
    %v65 = vlaneseq
    %v66 = vshrl.u32 %v65, 7
    %vm67 = vcmp.eq.f32.partialorder %v42, %v51
    %v68 = vsel %vm67, %v66, 8
    %v69 = vsel %vm44, %v68, 2147483647
    %v70 = vrot.slane %v69, 4
    %vm71 = vcmp.lt.s32.totalorder %v69, %v70
    %v72 = vsel %vm71, %v69, %v70
    %v73 = vrot.slane %v72, 2
    %vm74 = vcmp.lt.s32.totalorder %v72, %v73
    %v75 = vsel %vm74, %v72, %v73
    %v76 = vrot.slane %v75, 1
    %vm77 = vcmp.lt.s32.totalorder %v75, %v76
    %v78 = vsel %vm77, %v75, %v76
    %vm79 = vcmp.eq.s32.totalorder %v66, %v78
    %v80 = vsel %vm79, 1, 0
    %v81 = vcvt.s32.f32 %v80
    %v82 = vsel %vm44, %v81, 0.0
    %83 = vadd.xlane.f32.xlu0 %v82
    %v84 = vpop.xlane.xlu0 %83
    %v85 = vcvt.f32.s32.to.zero.pseudo %v84
    %vm86 = vcmask 7168
    %87 = vst.msk [vmem:[%s4] sm:$0xff] %vm86, %v85
    %v88 = vsel %vm44, %v64, 0.0
    %89 = vadd.xlane.f32.xlu0 %v88
    %v90 = vpop.xlane.xlu0 %89
    %v91 = vmul.f32 %v90, 0.015625
    %v92 = vmul.f32 %v84, 0.015625
    %v93 = vmul.f32 %v91, %v92
    %v94 = vrot.slane %v93, 4
    %v95 = vadd.f32 %v93, %v94
    %v96 = vrot.slane %v95, 2
    %v97 = vadd.f32 %v95, %v96
    %v98 = vrot.slane %v97, 1
    %v99 = vadd.f32 %v97, %v98
    %v100 = vmul.f32 %v99, 8.0
    %vm101 = vcmask 0
    %102 = vst.msk [vmem:[#allocation10] sm:$0x1] %vm101, %v100
    %v103 = vlaneseq
    %v104 = vand.u32 %v103, 127
    %vm105 = vcmp.gt.f32.partialorder %v81, 0.0
    %v106 = vsel %vm105, %v43, -1.0
    %v107 = vsel %vm44, %v106, -inf
    %108 = vmax.xlane.f32.xlu0 %v107
    %v109 = vpop.xlane.xlu0 %108
    %vm110 = vcmp.eq.f32.partialorder %v106, %v109
    %v111 = vsel %vm110, %v104, 64
    %v112 = vsel %vm44, %v111, 2147483647
    %v113 = vand.u32 %v112, 65535
    %v114 = vshra.s32 %v112, 16
    %v115 = vcvt.s32.f32 %v113
    %v116 = vcvt.s32.f32 %v114
    %117 = vmin.xlane.f32.xlu0 %v116
    %v118 = vpop.xlane.xlu0 %117
    %vm119 = vcmp.eq.f32.partialorder %v116, %v118
    %v120 = vsel %vm119, %v115, inf
    %121 = vmin.xlane.f32.xlu0 %v120
    %v122 = vpop.xlane.xlu0 %121
    %v123 = vcvt.f32.s32 %v122
    %v124 = vcvt.f32.s32 %v118
    %v125 = vshll.u32 %v124, 16
    %v126 = vadd.s32 %v125, %v123
    %vm127 = vcmp.eq.s32.totalorder %v104, %v126
    %vm128 = vcmp.gt.f32.partialorder %v109, -0.5
    %v129 = vsel %vm128, 1, 0
    %vm130 = vcmp.eq.s32.totalorder %v129, 1
    %vm131 = vmand %vm127, %vm130
    %v132 = vsel %vm131, 1, 0
    %v133 = vcvt.s32.f32 %v132
    %v134 = vadd.f32 %v133, 0.0
    %v135 = vsel %vm131, -1.0, %v106
    %v136 = vsel %vm44, %v135, -inf
    %137 = vmax.xlane.f32.xlu0 %v136
    %v138 = vpop.xlane.xlu0 %137
    %vm139 = vcmp.eq.f32.partialorder %v135, %v138
    %v140 = vsel %vm139, %v104, 64
    %v141 = vsel %vm44, %v140, 2147483647
    %v142 = vand.u32 %v141, 65535
    %v143 = vshra.s32 %v141, 16
    %v144 = vcvt.s32.f32 %v142
    %v145 = vcvt.s32.f32 %v143
    %146 = vmin.xlane.f32.xlu0 %v145
    %v147 = vpop.xlane.xlu0 %146
    %vm148 = vcmp.eq.f32.partialorder %v145, %v147
    %v149 = vsel %vm148, %v144, inf
    %150 = vmin.xlane.f32.xlu0 %v149
    %v151 = vpop.xlane.xlu0 %150
    %v152 = vcvt.f32.s32 %v151
    %v153 = vcvt.f32.s32 %v147
    %v154 = vshll.u32 %v153, 16
    %v155 = vadd.s32 %v154, %v152
    %vm156 = vcmp.eq.s32.totalorder %v104, %v155
    %vm157 = vcmp.gt.f32.partialorder %v138, -0.5
    %v158 = vsel %vm157, 1, 0
    %vm159 = vcmp.eq.s32.totalorder %v158, 1
    %vm160 = vmand %vm156, %vm159
    %v161 = vsel %vm160, 1, 0
    %v162 = vcvt.s32.f32 %v161
    %v163 = vadd.f32 %v134, %v162
    %v164 = vsel %vm160, -1.0, %v135
    %v165 = vsel %vm44, %v164, -inf
    %166 = vmax.xlane.f32.xlu0 %v165
    %v167 = vpop.xlane.xlu0 %166
    %vm168 = vcmp.eq.f32.partialorder %v164, %v167
    %v169 = vsel %vm168, %v104, 64
    %v170 = vsel %vm44, %v169, 2147483647
    %v171 = vand.u32 %v170, 65535
    %v172 = vshra.s32 %v170, 16
    %v173 = vcvt.s32.f32 %v171
    %v174 = vcvt.s32.f32 %v172
    %175 = vmin.xlane.f32.xlu0 %v174
    %v176 = vpop.xlane.xlu0 %175
    %vm177 = vcmp.eq.f32.partialorder %v174, %v176
    %v178 = vsel %vm177, %v173, inf
    %179 = vmin.xlane.f32.xlu0 %v178
    %v180 = vpop.xlane.xlu0 %179
    %v181 = vcvt.f32.s32 %v180
    %v182 = vcvt.f32.s32 %v176
    %v183 = vshll.u32 %v182, 16
    %v184 = vadd.s32 %v183, %v181
    %vm185 = vcmp.eq.s32.totalorder %v104, %v184
    %vm186 = vcmp.gt.f32.partialorder %v167, -0.5
    %v187 = vsel %vm186, 1, 0
    %vm188 = vcmp.eq.s32.totalorder %v187, 1
    %vm189 = vmand %vm185, %vm188
    %v190 = vsel %vm189, 1, 0
    %v191 = vcvt.s32.f32 %v190
    %v192 = vadd.f32 %v163, %v191
    %v193 = vsel %vm189, -1.0, %v164
    %v194 = vsel %vm44, %v193, -inf
    %195 = vmax.xlane.f32.xlu0 %v194
    %v196 = vpop.xlane.xlu0 %195
    %vm197 = vcmp.eq.f32.partialorder %v193, %v196
    %v198 = vsel %vm197, %v104, 64
    %v199 = vsel %vm44, %v198, 2147483647
    %v200 = vand.u32 %v199, 65535
    %v201 = vshra.s32 %v199, 16
    %v202 = vcvt.s32.f32 %v200
    %v203 = vcvt.s32.f32 %v201
    %204 = vmin.xlane.f32.xlu0 %v203
    %v205 = vpop.xlane.xlu0 %204
    %vm206 = vcmp.eq.f32.partialorder %v203, %v205
    %v207 = vsel %vm206, %v202, inf
    %208 = vmin.xlane.f32.xlu0 %v207
    %v209 = vpop.xlane.xlu0 %208
    %v210 = vcvt.f32.s32 %v209
    %v211 = vcvt.f32.s32 %v205
    %v212 = vshll.u32 %v211, 16
    %v213 = vadd.s32 %v212, %v210
    %vm214 = vcmp.eq.s32.totalorder %v104, %v213
    %vm215 = vcmp.gt.f32.partialorder %v196, -0.5
    %v216 = vsel %vm215, 1, 0
    %vm217 = vcmp.eq.s32.totalorder %v216, 1
    %vm218 = vmand %vm214, %vm217
    %v219 = vsel %vm218, 1, 0
    %v220 = vcvt.s32.f32 %v219
    %v221 = vadd.f32 %v192, %v220
    %v222 = vsel %vm218, -1.0, %v193
    %v223 = vsel %vm44, %v222, -inf
    %224 = vmax.xlane.f32.xlu0 %v223
    %v225 = vpop.xlane.xlu0 %224
    %vm226 = vcmp.eq.f32.partialorder %v222, %v225
    %v227 = vsel %vm226, %v104, 64
    %v228 = vsel %vm44, %v227, 2147483647
    %v229 = vand.u32 %v228, 65535
    %v230 = vshra.s32 %v228, 16
    %v231 = vcvt.s32.f32 %v229
    %v232 = vcvt.s32.f32 %v230
    %233 = vmin.xlane.f32.xlu0 %v232
    %v234 = vpop.xlane.xlu0 %233
    %vm235 = vcmp.eq.f32.partialorder %v232, %v234
    %v236 = vsel %vm235, %v231, inf
    %237 = vmin.xlane.f32.xlu0 %v236
    %v238 = vpop.xlane.xlu0 %237
    %v239 = vcvt.f32.s32 %v238
    %v240 = vcvt.f32.s32 %v234
    %v241 = vshll.u32 %v240, 16
    %v242 = vadd.s32 %v241, %v239
    %vm243 = vcmp.eq.s32.totalorder %v104, %v242
    %vm244 = vcmp.gt.f32.partialorder %v225, -0.5
    %v245 = vsel %vm244, 1, 0
    %vm246 = vcmp.eq.s32.totalorder %v245, 1
    %vm247 = vmand %vm243, %vm246
    %v248 = vsel %vm247, 1, 0
    %v249 = vcvt.s32.f32 %v248
    %v250 = vadd.f32 %v221, %v249
    %v251 = vsel %vm247, -1.0, %v222
    %v252 = vsel %vm44, %v251, -inf
    %253 = vmax.xlane.f32.xlu0 %v252
    %v254 = vpop.xlane.xlu0 %253
    %vm255 = vcmp.eq.f32.partialorder %v251, %v254
    %v256 = vsel %vm255, %v104, 64
    %v257 = vsel %vm44, %v256, 2147483647
    %v258 = vand.u32 %v257, 65535
    %v259 = vshra.s32 %v257, 16
    %v260 = vcvt.s32.f32 %v258
    %v261 = vcvt.s32.f32 %v259
    %262 = vmin.xlane.f32.xlu0 %v261
    %v263 = vpop.xlane.xlu0 %262
    %vm264 = vcmp.eq.f32.partialorder %v261, %v263
    %v265 = vsel %vm264, %v260, inf
    %266 = vmin.xlane.f32.xlu0 %v265
    %v267 = vpop.xlane.xlu0 %266
    %v268 = vcvt.f32.s32 %v267
    %v269 = vcvt.f32.s32 %v263
    %v270 = vshll.u32 %v269, 16
    %v271 = vadd.s32 %v270, %v268
    %vm272 = vcmp.eq.s32.totalorder %v104, %v271
    %vm273 = vcmp.gt.f32.partialorder %v254, -0.5
    %v274 = vsel %vm273, 1, 0
    %vm275 = vcmp.eq.s32.totalorder %v274, 1
    %vm276 = vmand %vm272, %vm275
    %v277 = vsel %vm276, 1, 0
    %v278 = vcvt.s32.f32 %v277
    %v279 = vadd.f32 %v250, %v278
    %v280 = vsel %vm276, -1.0, %v251
    %v281 = vsel %vm44, %v280, -inf
    %282 = vmax.xlane.f32.xlu0 %v281
    %v283 = vpop.xlane.xlu0 %282
    %vm284 = vcmp.eq.f32.partialorder %v280, %v283
    %v285 = vsel %vm284, %v104, 64
    %v286 = vsel %vm44, %v285, 2147483647
    %v287 = vand.u32 %v286, 65535
    %v288 = vshra.s32 %v286, 16
    %v289 = vcvt.s32.f32 %v287
    %v290 = vcvt.s32.f32 %v288
    %291 = vmin.xlane.f32.xlu0 %v290
    %v292 = vpop.xlane.xlu0 %291
    %vm293 = vcmp.eq.f32.partialorder %v290, %v292
    %v294 = vsel %vm293, %v289, inf
    %295 = vmin.xlane.f32.xlu0 %v294
    %v296 = vpop.xlane.xlu0 %295
    %v297 = vcvt.f32.s32 %v296
    %v298 = vcvt.f32.s32 %v292
    %v299 = vshll.u32 %v298, 16
    %v300 = vadd.s32 %v299, %v297
    %vm301 = vcmp.eq.s32.totalorder %v104, %v300
    %vm302 = vcmp.gt.f32.partialorder %v283, -0.5
    %v303 = vsel %vm302, 1, 0
    %vm304 = vcmp.eq.s32.totalorder %v303, 1
    %vm305 = vmand %vm301, %vm304
    %v306 = vsel %vm305, 1, 0
    %v307 = vcvt.s32.f32 %v306
    %v308 = vadd.f32 %v279, %v307
    %v309 = vsel %vm305, -1.0, %v280
    %v310 = vsel %vm44, %v309, -inf
    %311 = vmax.xlane.f32.xlu0 %v310
    %v312 = vpop.xlane.xlu0 %311
    %vm313 = vcmp.eq.f32.partialorder %v309, %v312
    %v314 = vsel %vm313, %v104, 64
    %v315 = vsel %vm44, %v314, 2147483647
    %v316 = vand.u32 %v315, 65535
    %v317 = vshra.s32 %v315, 16
    %v318 = vcvt.s32.f32 %v316
    %v319 = vcvt.s32.f32 %v317
    %320 = vmin.xlane.f32.xlu0 %v319
    %v321 = vpop.xlane.xlu0 %320
    %vm322 = vcmp.eq.f32.partialorder %v319, %v321
    %v323 = vsel %vm322, %v318, inf
    %324 = vmin.xlane.f32.xlu0 %v323
    %v325 = vpop.xlane.xlu0 %324
    %v326 = vcvt.f32.s32 %v325
    %v327 = vcvt.f32.s32 %v321
    %v328 = vshll.u32 %v327, 16
    %v329 = vadd.s32 %v328, %v326
    %vm330 = vcmp.eq.s32.totalorder %v104, %v329
    %vm331 = vcmp.gt.f32.partialorder %v312, -0.5
    %v332 = vsel %vm331, 1, 0
    %vm333 = vcmp.eq.s32.totalorder %v332, 1
    %vm334 = vmand %vm330, %vm333
    %v335 = vsel %vm334, 1, 0
    %v336 = vcvt.s32.f32 %v335
    %v337 = vadd.f32 %v308, %v336
    %v338 = vmul.f32 %v81, %v337
    %v339 = vadd.s32 %v66, 8
    %v340 = vadd.s32 %v66, 16
    %v341 = vadd.s32 %v66, 24
    %v342 = vadd.s32 %v66, 32
    %v343 = vadd.s32 %v66, 40
    %v344 = vadd.s32 %v66, 48
    %v345 = vadd.s32 %v66, 56
    %vm346 = vcmp.le.s32.totalorder %v66, %v104
    %vm347 = vcmp.le.s32.totalorder %v339, %v104
    %vm348 = vcmp.le.s32.totalorder %v340, %v104
    %vm349 = vcmp.le.s32.totalorder %v341, %v104
    %vm350 = vcmp.le.s32.totalorder %v342, %v104
    %vm351 = vcmp.le.s32.totalorder %v343, %v104
    %vm352 = vcmp.le.s32.totalorder %v344, %v104
    %vm353 = vcmp.le.s32.totalorder %v345, %v104
    %v354 = vsel %vm346, 1, 0
    %v355 = vsel %vm347, 1, 0
    %v356 = vsel %vm348, 1, 0
    %v357 = vsel %vm349, 1, 0
    %v358 = vsel %vm350, 1, 0
    %v359 = vsel %vm351, 1, 0
    %v360 = vsel %vm352, 1, 0
    %v361 = vsel %vm353, 1, 0
    %v362 = vcvt.s32.f32 %v354
    %v363 = vcvt.s32.f32 %v355
    %v364 = vcvt.s32.f32 %v356
    %v365 = vcvt.s32.f32 %v357
    %v366 = vcvt.s32.f32 %v358
    %v367 = vcvt.s32.f32 %v359
    %v368 = vcvt.s32.f32 %v360
    %v369 = vcvt.s32.f32 %v361
    %v370 = vpack.c.bf16 %v363, %v362
    %v371 = vpack.c.bf16 %v365, %v364
    %v372 = vpack.c.bf16 %v367, %v366
    %v373 = vpack.c.bf16 %v369, %v368
    %v374 = vpack.c.bf16 %v338, %v338
    %v376 = vsel %vm44, %v374, 0
    %378 = vmatprep.subr.bf16.mxu0 0
    %379 = vmatpush1.bf16.msra.mxu0 %v370
    %380 = vmatprep.subr.bf16.mxu0 0
    %381 = vmatpush1.bf16.msra.mxu0 %v371
    %382 = vmatprep.subr.bf16.mxu0 0
    %383 = vmatpush1.bf16.msra.mxu0 %v372
    %384 = vmatprep.subr.bf16.mxu0 0
    %385 = vmatpush1.bf16.msra.mxu0 %v373
    %386 = vmatprep.subr.bf16.mxu0 0
    %387 = vmatpush1.bf16.msra.mxu0 0
    %388 = vmatprep.subr.bf16.mxu0 0
    %389 = vmatpush1.bf16.msra.mxu0 0
    %390 = vmatprep.subr.bf16.mxu0 0
    %391 = vmatpush1.bf16.msra.mxu0 0
    %392 = vmatprep.subr.bf16.mxu0 0
    %393 = vmatpush1.bf16.msra.mxu0 0
    %394 = vmatprep.subr.bf16.mxu0 0
    %395 = vmatpush1.bf16.msra.mxu0 0
    %396 = vmatprep.subr.bf16.mxu0 0
    %397 = vmatpush1.bf16.msra.mxu0 0
    %398 = vmatprep.subr.bf16.mxu0 0
    %399 = vmatpush1.bf16.msra.mxu0 0
    %400 = vmatprep.subr.bf16.mxu0 0
    %401 = vmatpush1.bf16.msra.mxu0 0
    %402 = vmatprep.subr.bf16.mxu0 0
    %403 = vmatpush1.bf16.msra.mxu0 0
    %404 = vmatprep.subr.bf16.mxu0 0
    %405 = vmatpush1.bf16.msra.mxu0 0
    %406 = vmatprep.subr.bf16.mxu0 0
    %407 = vmatpush1.bf16.msra.mxu0 0
    %408 = vmatprep.subr.bf16.mxu0 0
    %409 = vmatpush1.bf16.msra.mxu0 0
    %410 = vmatprep.mubr.bf16.mxu0 0
    %411 = vmatmul.mubr.bf16.gmra.mrb[0].mxu0 %v376
    %v412 = vpop.f32.mrb[0].mxu0
    %v413 = vadd.f32 0.0, %v412
    %v414 = vpop.f32.mrb[0].mxu0
    %v415 = vpop.f32.mrb[0].mxu0
    %v416 = vpop.f32.mrb[0].mxu0
    %417 = vdwg.mxu0
    %v418 = vsub.f32 %v413, 1.0
    %v419 = vmul.f32 %v338, %v418
    %v420 = vsel %vm44, %v419, 0.0
    %v421 = vrot.slane %v420, 4
    %v422 = vadd.f32 %v420, %v421
    %v423 = vrot.slane %v422, 2
    %v424 = vadd.f32 %v422, %v423
    %v425 = vrot.slane %v424, 1
    %v426 = vadd.f32 %v424, %v425
    %v427 = vmul.f32 %v64, %v338
    %v428 = vsel %vm44, %v427, 0.0
    %v429 = vrot.slane %v428, 4
    %v430 = vadd.f32 %v428, %v429
    %v431 = vrot.slane %v430, 2
    %v432 = vadd.f32 %v430, %v431
    %v433 = vrot.slane %v432, 1
    %v434 = vadd.f32 %v432, %v433
    %vm435 = vcmask 516096
    %436 = vst.msk [vmem:[#allocation7] sm:$0x1] %vm435, %v434
    %v437 = vsel %vm44, %v338, 0.0
    %v438 = vrot.slane %v437, 4
    %v439 = vadd.f32 %v437, %v438
    %v440 = vrot.slane %v439, 2
    %v441 = vadd.f32 %v439, %v440
    %v442 = vrot.slane %v441, 1
    %v443 = vadd.f32 %v441, %v442
    %v444 = vmul.u32 %v78, 8
    %v445 = vcvt.f32.s32.to.zero.pseudo %v426
    %v446 = vadd.s32 %v444, %v445
    %vm447 = vcmp.gt.f32.partialorder %v443, 0.5
    %v448 = vsel %vm447, %v446, 4294967295
    %449 = vst.msk [vmem:[#allocation8] sm:$0x1] %vm435, %v448
    // Predicated region
    $region18: #{tpu_custom_call.1} parent=1 // pred_check
      _
    $region19: #{tpu_custom_call.1} parent=1 // pred_check_branch
      %451 = sbr.rel (0) target = $region21
    $region20: #{tpu_custom_call.1} parent=1 // pred_region
      %s453 = ssub.s32 16, 16
      %454 = vsyncadd [#allocation4], %s453
      %s456 = sshll.u32 [#allocation7], 4
      %s457 = int_to_ptr.vmem [resolvable:$true] %s456
      %459 = dma.vmem_to_hbm [thread:$0]  %s457, 16, %s2, [#allocation4]
    $region21: #{tpu_custom_call.1} parent=1 // pred_fallthru
      _
    // Predicated region
    $region22: #{tpu_custom_call.1} parent=1 // pred_check
      _
    $region23: #{tpu_custom_call.1} parent=1 // pred_check_branch
      %461 = sbr.rel (0) target = $region25
    $region24: #{tpu_custom_call.1} parent=1 // pred_region
      %s463 = ssub.s32 16, 16
      %464 = vsyncadd [#allocation9], %s463
      %s466 = sshll.u32 [#allocation8], 4
      %s467 = int_to_ptr.vmem [resolvable:$true] %s466
      %469 = dma.vmem_to_hbm [thread:$0]  %s467, 16, %s3, [#allocation9]
    $region25: #{tpu_custom_call.1} parent=1 // pred_fallthru
      _
    // Predicated region
    $region26: #{tpu_custom_call.1} parent=1 // pred_check
      _
    $region27: #{tpu_custom_call.1} parent=1 // pred_check_branch
      %471 = sbr.rel (0) target = $region29
    $region28: #{tpu_custom_call.1} parent=1 // pred_region
      _
    $region29: #{tpu_custom_call.1} parent=1 // pred_fallthru
      _
    // Predicated region
    $region30: #{tpu_custom_call.1} parent=1 // pred_check
      _
    $region31: #{tpu_custom_call.1} parent=1 // pred_check_branch
      %473 = sbr.rel (0) target = $region33
    $region32: #{tpu_custom_call.1} parent=1 // pred_region
      %s475 = ssub.s32 16, 16
      %476 = vsyncadd [#allocation9], %s475
      %s478 = sshll.u32 [#allocation10], 4
      %s479 = int_to_ptr.vmem [resolvable:$true] %s478
      %481 = dma.vmem_to_hbm [thread:$0]  %s479, 16, %s5, [#allocation9]
    $region33: #{tpu_custom_call.1} parent=1 // pred_fallthru
      _
    // Predicated region
    $region34: #{tpu_custom_call.1} parent=1 // pred_check
      _
    $region35: #{tpu_custom_call.1} parent=1 // pred_check_branch
      %483 = sbr.rel (0) target = $region37
    $region36: #{tpu_custom_call.1} parent=1 // pred_region
      %484 = dma.done [#allocation4], 16
    $region37: #{tpu_custom_call.1} parent=1 // pred_fallthru
      _
    // Predicated region
    $region38: #{tpu_custom_call.1} parent=1 // pred_check
      _
    $region39: #{tpu_custom_call.1} parent=1 // pred_check_branch
      %486 = sbr.rel (0) target = $region41
    $region40: #{tpu_custom_call.1} parent=1 // pred_region
      %487 = dma.done [#allocation9], 16
    $region41: #{tpu_custom_call.1} parent=1 // pred_fallthru
      _
    // Predicated region
    $region42: #{tpu_custom_call.1} parent=1 // pred_check
      _
    $region43: #{tpu_custom_call.1} parent=1 // pred_check_branch
      %489 = sbr.rel (0) target = $region45
    $region44: #{tpu_custom_call.1} parent=1 // pred_region
      _
    $region45: #{tpu_custom_call.1} parent=1 // pred_fallthru
      _
    // Predicated region
    $region46: #{tpu_custom_call.1} parent=1 // pred_check
      _
    $region47: #{tpu_custom_call.1} parent=1 // pred_check_branch
      %491 = sbr.rel (0) target = $region49
    $region48: #{tpu_custom_call.1} parent=1 // pred_region
      %492 = dma.done [#allocation9], 16
    $region49: #{tpu_custom_call.1} parent=1 // pred_fallthru
      _
    %493 = vsyncpa [#allocation3], 1
    %494 = vsyncpa [#allocation6], 1
    %495 = vsyncpa [#allocation4], 1
    %496 = vsyncpa [#allocation9], 1

</llo_original>
